<compile_context>
chip_gen: v6e
topology: v6e:2x2x1
jax: 0.10.0
libtpu: 0.0.40
codegen_flags: <defaults>
</compile_context>

<pallas_src>
import functools

import jax
import jax.numpy as jnp
from jax.experimental import pallas as pl
from jax.experimental.pallas import tpu as pltpu

_EPS = 1e-6  # torch.nn.functional.pairwise_distance default eps


def _soft_margin_ranking_kernel(a_ref, p_ref, n_ref, o_ref, *, alpha, n_total):
    tile_n = a_ref.shape[0]

    a = a_ref[...].astype(jnp.float32)
    p = p_ref[...].astype(jnp.float32)
    n = n_ref[...].astype(jnp.float32)

    # squared pairwise L2 distance per row, keepdim -> (tile_n, 1)
    diff_pos = a - p + _EPS
    diff_neg = a - n + _EPS
    dist_pos = jnp.sum(diff_pos * diff_pos, axis=-1, keepdims=True)
    dist_neg = jnp.sum(diff_neg * diff_neg, axis=-1, keepdims=True)

    x = alpha * (dist_pos - dist_neg)                       # (tile_n, 1)
    # numerically stable softplus == log(1 + exp(x)); EUP work on tile_n elems
    loss = jnp.maximum(x, 0.0) + jnp.log1p(jnp.exp(-jnp.abs(x)))

    # mask rows of a (possibly partial) last tile that lie beyond N
    i = pl.program_id(0)
    row = jax.lax.broadcasted_iota(jnp.int32, (tile_n, 1), 0)
    valid = (i * tile_n + row) < n_total
    loss = jnp.where(valid, loss, 0.0)

    # per-block partial sum -> (1,1) SMEM output block for this grid step
    o_ref[0, 0] = jnp.sum(loss)


def _choose_tile_n(n, d, itemsize):
    """Largest batch tile keeping 3 inputs x 2 pipeline buffers well under the
    smallest per-generation scoped-VMEM budget (v7x: 32 MiB default)."""
    budget_bytes = 18 * 1024 * 1024
    max_rows = max(8, budget_bytes // (6 * d * itemsize))
    tile = min(1024, max_rows)
    tile = max(8, (tile // 8) * 8)     # sublane-aligned when actually tiling
    if tile >= n:
        return n                       # single full-array block
    return tile


def soft_margin_ranking_loss(anchor, positive, negative, alpha=1.0, tile_n=None):
    """anchor/positive/negative: (N, D) arrays. Returns scalar float32 loss."""
    n, d = anchor.shape
    if tile_n is None:
        tile_n = _choose_tile_n(n, d, jnp.dtype(anchor.dtype).itemsize)
    num_blocks = pl.cdiv(n, tile_n)

    kernel = functools.partial(
        _soft_margin_ranking_kernel, alpha=float(alpha), n_total=n)

    def in_spec():
        return pl.BlockSpec((tile_n, d), lambda i: (i, 0))

    partial_sums = pl.pallas_call(
        kernel,
        grid=(num_blocks,),
        out_shape=jax.ShapeDtypeStruct((num_blocks, 1), jnp.float32),
        in_specs=[in_spec(), in_spec(), in_spec()],
        out_specs=pl.BlockSpec(
            (1, 1), lambda i: (i, 0), memory_space=pltpu.MemorySpace.SMEM),
        compiler_params=pltpu.CompilerParams(
            dimension_semantics=("parallel",),
            vmem_limit_bytes=32 * 1024 * 1024,
        ),
    )(anchor, positive, negative)

    # tiny final reduction in the wrapper (keeps the grid axis megacore-shardable)
    return jnp.sum(partial_sums) / n


def _reference(anchor, positive, negative, alpha=1.0):
    a = anchor.astype(jnp.float32)
    p = positive.astype(jnp.float32)
    g = negative.astype(jnp.float32)
    dp = jnp.sum(jnp.square(a - p + _EPS), axis=-1, keepdims=True)
    dn = jnp.sum(jnp.square(a - g + _EPS), axis=-1, keepdims=True)
    x = alpha * (dp - dn)
    return jnp.mean(jnp.maximum(x, 0.0) + jnp.log1p(jnp.exp(-jnp.abs(x))))


if __name__ == "__main__":
    key = jax.random.PRNGKey(0)
    k_a, k_p, k_n, k2 = jax.random.split(key, 4)

    # Case 1: module-sized example (batch=8, hidden=32) -> single block.
    N, D = 8, 32
    anchor = jax.random.normal(k_a, (N, D), dtype=jnp.float32)
    positive = jax.random.normal(k_p, (N, D), dtype=jnp.float32)
    negative = jax.random.normal(k_n, (N, D), dtype=jnp.float32)

    loss = jax.block_until_ready(
        soft_margin_ranking_loss(anchor, positive, negative, alpha=1.0))
    ref = _reference(anchor, positive, negative, alpha=1.0)
    assert jnp.allclose(loss, ref, rtol=1e-5, atol=1e-5), (loss, ref)

    # Case 2: exercise the tiled + masked path (N=20 not a multiple of tile_n=8).
    k_a2, k_p2, k_n2 = jax.random.split(k2, 3)
    N2, D2 = 20, 32
    anchor2 = jax.random.normal(k_a2, (N2, D2), dtype=jnp.float32)
    positive2 = jax.random.normal(k_p2, (N2, D2), dtype=jnp.float32)
    negative2 = jax.random.normal(k_n2, (N2, D2), dtype=jnp.float32)

    loss2 = jax.block_until_ready(
        soft_margin_ranking_loss(anchor2, positive2, negative2, alpha=1.0,
                                 tile_n=8))
    ref2 = _reference(anchor2, positive2, negative2, alpha=1.0)
    assert jnp.allclose(loss2, ref2, rtol=1e-5, atol=1e-5), (loss2, ref2)

    print("KERNEL_OK")
</pallas_src>

<mosaic_0001>
module attributes {stable_mosaic.version = 11 : i64} {
  func.func @_soft_margin_ranking_kernel(%arg0: i32, %arg1: memref<8x32xf32, #tpu.memory_space<vmem>>, %arg2: memref<8x32xf32, #tpu.memory_space<vmem>>, %arg3: memref<8x32xf32, #tpu.memory_space<vmem>>, %arg4: memref<1x1xf32, #tpu.memory_space<smem>>) attributes {dimension_semantics = [#tpu.dimension_semantics<parallel>], iteration_bounds = array<i64: 1>, scalar_prefetch = 0 : i64, scratch_operands = 0 : i64, tpu.core_type = #tpu.core_type<tc>, window_params = [{transform_indices = @transform_0, window_bounds = array<i64: 8, 32>}, {transform_indices = @transform_1, window_bounds = array<i64: 8, 32>}, {transform_indices = @transform_2, window_bounds = array<i64: 8, 32>}, {transform_indices = @transform_3, window_bounds = array<i64: 1, 1>}]} {
    %c0 = arith.constant 0 : index
    %c0_0 = arith.constant 0 : index
    %0 = vector.load %arg1[%c0, %c0_0] : memref<8x32xf32, #tpu.memory_space<vmem>>, vector<8x32xf32>
    %c0_1 = arith.constant 0 : index
    %c0_2 = arith.constant 0 : index
    %1 = vector.load %arg2[%c0_1, %c0_2] : memref<8x32xf32, #tpu.memory_space<vmem>>, vector<8x32xf32>
    %c0_3 = arith.constant 0 : index
    %c0_4 = arith.constant 0 : index
    %2 = vector.load %arg3[%c0_3, %c0_4] : memref<8x32xf32, #tpu.memory_space<vmem>>, vector<8x32xf32>
    %3 = arith.subf %0, %1 : vector<8x32xf32>
    %cst = arith.constant 9.99999997E-7 : f32
    %4 = vector.broadcast %cst : f32 to vector<8x32xf32>
    %5 = arith.addf %3, %4 : vector<8x32xf32>
    %6 = arith.subf %0, %2 : vector<8x32xf32>
    %cst_5 = arith.constant 9.99999997E-7 : f32
    %7 = vector.broadcast %cst_5 : f32 to vector<8x32xf32>
    %8 = arith.addf %6, %7 : vector<8x32xf32>
    %9 = arith.mulf %5, %5 : vector<8x32xf32>
    %cst_6 = arith.constant dense<0.000000e+00> : vector<8xf32>
    %10 = vector.multi_reduction <add>, %9, %cst_6 [1] : vector<8x32xf32> to vector<8xf32>
    %11 = vector.shape_cast %10 : vector<8xf32> to vector<8x1xf32>
    %12 = arith.mulf %8, %8 : vector<8x32xf32>
    %cst_7 = arith.constant dense<0.000000e+00> : vector<8xf32>
    %13 = vector.multi_reduction <add>, %12, %cst_7 [1] : vector<8x32xf32> to vector<8xf32>
    %14 = vector.shape_cast %13 : vector<8xf32> to vector<8x1xf32>
    %15 = arith.subf %11, %14 : vector<8x1xf32>
    %cst_8 = arith.constant 1.000000e+00 : f32
    %16 = vector.broadcast %cst_8 : f32 to vector<8x1xf32>
    %17 = arith.mulf %16, %15 : vector<8x1xf32>
    %cst_9 = arith.constant 0.000000e+00 : f32
    %18 = vector.broadcast %cst_9 : f32 to vector<8x1xf32>
    %19 = arith.maximumf %17, %18 : vector<8x1xf32>
    %20 = math.absf %17 : vector<8x1xf32>
    %cst_10 = arith.constant 0.000000e+00 : f32
    %21 = vector.broadcast %cst_10 : f32 to vector<8x1xf32>
    %22 = arith.subf %21, %20 : vector<8x1xf32>
    %23 = math.exp %22 : vector<8x1xf32>
    %24 = math.log1p %23 : vector<8x1xf32>
    %25 = arith.addf %19, %24 : vector<8x1xf32>
    %26 = tpu.iota {dimensions = array<i32: 0>} : vector<8x1xi32>
    %c8_i32 = arith.constant 8 : i32
    %27 = arith.muli %arg0, %c8_i32 : i32
    %28 = vector.broadcast %27 : i32 to vector<8x1xi32>
    %29 = arith.addi %28, %26 : vector<8x1xi32>
    %c8_i32_11 = arith.constant 8 : i32
    %30 = vector.broadcast %c8_i32_11 : i32 to vector<8x1xi32>
    %31 = arith.cmpi slt, %29, %30 : vector<8x1xi32>
    %cst_12 = arith.constant 0.000000e+00 : f32
    %32 = vector.broadcast %cst_12 : f32 to vector<8x1xf32>
    %33 = arith.select %31, %25, %32 : vector<8x1xi1>, vector<8x1xf32>
    %34 = vector.shape_cast %33 : vector<8x1xf32> to vector<1x8x1xf32>
    %cst_13 = arith.constant dense<0.000000e+00> : vector<1xf32>
    %35 = vector.multi_reduction <add>, %34, %cst_13 [1, 2] : vector<1x8x1xf32> to vector<1xf32>
    %36 = vector.shape_cast %35 : vector<1xf32> to vector<1x1x1xf32>
    %37 = vector.extract %36[0, 0, 0] : f32 from vector<1x1x1xf32>
    %c0_14 = arith.constant 0 : index
    %c0_15 = arith.constant 0 : index
    %38 = memref.load %arg4[%c0_14, %c0_15] : memref<1x1xf32, #tpu.memory_space<smem>>
    memref.store %37, %arg4[%c0_14, %c0_15] : memref<1x1xf32, #tpu.memory_space<smem>>
    return
  }
  func.func @transform_0(%arg0: i32) -> (i32, i32) {
    %c0_i32 = arith.constant 0 : i32
    %c0_i32_0 = arith.constant 0 : i32
    return %arg0, %c0_i32 : i32, i32
  }
  func.func @transform_1(%arg0: i32) -> (i32, i32) {
    %c0_i32 = arith.constant 0 : i32
    %c0_i32_0 = arith.constant 0 : i32
    return %arg0, %c0_i32 : i32, i32
  }
  func.func @transform_2(%arg0: i32) -> (i32, i32) {
    %c0_i32 = arith.constant 0 : i32
    %c0_i32_0 = arith.constant 0 : i32
    return %arg0, %c0_i32 : i32, i32
  }
  func.func @transform_3(%arg0: i32) -> (i32, i32) {
    %c0_i32 = arith.constant 0 : i32
    %c0_i32_0 = arith.constant 0 : i32
    return %arg0, %c0_i32 : i32, i32
  }
}

</mosaic_0001>

<llo_original>
// kernel: tpu_custom_call.1
$region0: #{tpu_custom_call.1}
  #allocation0 [shape = 'u32[]', space=smem, size = 0x4, offset = 0x4, fixed_abs, tag = 'smem constant byte address 0x4 - core index']
  #allocation1 [shape = 'u32[144,128]{1,0:T(1,128)}', space=vmem, size = 0x12000, scoped, tag = 'internal scratch']
  %s0 = inlined_call_operand.hbm [shape: f32[8,32], index: 0, kind: input, shape index: {}]
  %s1 = inlined_call_operand.hbm [shape: f32[8,32], index: 1, kind: input, shape index: {}]
  %s2 = inlined_call_operand.hbm [shape: f32[8,32], index: 2, kind: input, shape index: {}]
  %s3 = inlined_call_operand.hbm [shape: f32[1,1], index: 3, kind: output, shape index: {}]
  %s4 = sld [smem:[#allocation0]]
  $region34: #{tpu_custom_call.1} parent=0
    _
  %s6 = ssub.s32 1, %s4
  %s7 = scalar_select 0, %s6, %s4
  $region1: #{tpu_custom_call.1} parent=0
    #allocation2 [shape = 'u8[4096]{0}', space=vmem, size = 0x1000, scoped, tag = 'input window, operand 0, single buffered']
    #allocation3 [shape = 's32[1]{0}', space=sflag, size = 0x4, scoped, tag = 'scoped memory for tpu_custom_call.1']
    #allocation4 [shape = 's32[1]{0}', space=sflag, size = 0x4, scoped, tag = 'scoped memory for tpu_custom_call.1']
    #allocation5 [shape = 'u8[4096]{0}', space=vmem, size = 0x1000, scoped, tag = 'input window, operand 1, single buffered']
    #allocation6 [shape = 's32[1]{0}', space=sflag, size = 0x4, scoped, tag = 'scoped memory for tpu_custom_call.1']
    #allocation7 [shape = 'u8[4096]{0}', space=vmem, size = 0x1000, scoped, tag = 'input window, operand 2, single buffered']
    #allocation8 [shape = 'u8[512]{0}', space=smem, size = 0x200, scoped, tag = 'output window, operand 0, single buffered']
    %8 = vsyncpa [#allocation3], 0
    %9 = vsyncpa [#allocation6], 0
    %10 = vsyncpa [#allocation4], 0
    // Predicated region
    $region2: #{tpu_custom_call.1} parent=1 // pred_check
      _
    $region3: #{tpu_custom_call.1} parent=1 // pred_check_branch
      %12 = sbr.rel (0) target = $region5
    $region4: #{tpu_custom_call.1} parent=1 // pred_region
      %s14 = ssub.s32 128, 128
      %15 = vsyncadd [#allocation3], %s14
      %s17 = sshll.u32 [#allocation2], 4
      %s18 = int_to_ptr.vmem [resolvable:$true] %s17
      %20 = dma.hbm_to_vmem [thread:$0]  %s0, 128, %s18, [#allocation3]
    $region5: #{tpu_custom_call.1} parent=1 // pred_fallthru
      _
    // Predicated region
    $region6: #{tpu_custom_call.1} parent=1 // pred_check
      _
    $region7: #{tpu_custom_call.1} parent=1 // pred_check_branch
      %22 = sbr.rel (0) target = $region9
    $region8: #{tpu_custom_call.1} parent=1 // pred_region
      %s24 = ssub.s32 128, 128
      %25 = vsyncadd [#allocation6], %s24
      %s27 = sshll.u32 [#allocation5], 4
      %s28 = int_to_ptr.vmem [resolvable:$true] %s27
      %30 = dma.hbm_to_vmem [thread:$0]  %s1, 128, %s28, [#allocation6]
    $region9: #{tpu_custom_call.1} parent=1 // pred_fallthru
      _
    // Predicated region
    $region10: #{tpu_custom_call.1} parent=1 // pred_check
      _
    $region11: #{tpu_custom_call.1} parent=1 // pred_check_branch
      %32 = sbr.rel (0) target = $region13
    $region12: #{tpu_custom_call.1} parent=1 // pred_region
      %s34 = ssub.s32 128, 128
      %35 = vsyncadd [#allocation6], %s34
      %s37 = sshll.u32 [#allocation7], 4
      %s38 = int_to_ptr.vmem [resolvable:$true] %s37
      %40 = dma.hbm_to_vmem [thread:$0]  %s2, 128, %s38, [#allocation6]
    $region13: #{tpu_custom_call.1} parent=1 // pred_fallthru
      _
    // Predicated region
    $region14: #{tpu_custom_call.1} parent=1 // pred_check
      _
    $region15: #{tpu_custom_call.1} parent=1 // pred_check_branch
      %42 = sbr.rel (0) target = $region17
    $region16: #{tpu_custom_call.1} parent=1 // pred_region
      %43 = dma.done [#allocation3], 128
    $region17: #{tpu_custom_call.1} parent=1 // pred_fallthru
      _
    // Predicated region
    $region18: #{tpu_custom_call.1} parent=1 // pred_check
      _
    $region19: #{tpu_custom_call.1} parent=1 // pred_check_branch
      %45 = sbr.rel (0) target = $region21
    $region20: #{tpu_custom_call.1} parent=1 // pred_region
      %46 = dma.done [#allocation6], 128
    $region21: #{tpu_custom_call.1} parent=1 // pred_fallthru
      _
    // Predicated region
    $region22: #{tpu_custom_call.1} parent=1 // pred_check
      _
    $region23: #{tpu_custom_call.1} parent=1 // pred_check_branch
      %48 = sbr.rel (0) target = $region25
    $region24: #{tpu_custom_call.1} parent=1 // pred_region
      %49 = dma.done [#allocation6], 128
    $region25: #{tpu_custom_call.1} parent=1 // pred_fallthru
      _
    %v50 = vld [vmem:[#allocation2] sm:$0xff]
    %v51 = vld [vmem:[#allocation5] sm:$0xff]
    %v52 = vld [vmem:[#allocation7] sm:$0xff]
    %v53 = vsub.f32 %v50, %v51
    %v54 = vadd.f32 %v53, 1e-06
    %v55 = vsub.f32 %v50, %v52
    %v56 = vadd.f32 %v55, 1e-06
    %v57 = vmul.f32 %v54, %v54
    %vm58 = vcmask 261120
    %v59 = vsel %vm58, %v57, 0.0
    %60 = vadd.xlane.f32.xlu0 %v59
    %v61 = vpop.xlane.xlu0 %60
    %v62 = vmul.f32 %v56, %v56
    %v63 = vsel %vm58, %v62, 0.0
    %64 = vadd.xlane.f32.xlu0 %v63
    %v65 = vpop.xlane.xlu0 %64
    %v66 = vsub.f32 %v61, %v65
    %v67 = vmax.f32 %v66, 0.0
    %v68 = vand.u32 2147483647, %v66
    %v69 = vsub.f32 0.0, %v68
    %v70 = vmul.f32 %v69, 1.442695
    %v71 = vpow.pop %v70
    %v72 = vadd.f32 %v71, 1.0
    %v73 = vlog2.pop %v72
    %v74 = vmul.f32 %v73, 0.6931472
    %v75 = vmul.f32 -0.5, %v71
    %v76 = vadd.f32 %v75, 1.0
    %v77 = vmul.f32 %v76, %v71
    %v78 = vand.u32 2147483647, %v71
    %vm79 = vcmp.lt.f32.partialorder %v78, 0.0004427343
    %v80 = vsel %vm79, %v77, %v74
    %v81 = vadd.f32 %v67, %v80
    %v82 = vlaneseq
    %v83 = vshrl.u32 %v82, 7
    %s84 = smul.u32 0, 8
    %v85 = vstv %s84
    %v86 = vadd.s32 %v85, %v83
    %vm87 = vcmp.lt.s32.totalorder %v86, 8
    %v88 = vsel %vm87, %v81, 0.0
    %vm89 = vcmask 7168
    %v90 = vsel %vm89, %v88, 0.0
    %91 = vadd.xlane.f32.xlu0 %v90
    %v92 = vpop.xlane.xlu0 %91
    %v93 = vrot.slane %v92, 4
    %v94 = vadd.f32 %v92, %v93
    %v95 = vrot.slane %v94, 2
    %v96 = vadd.f32 %v94, %v95
    %v97 = vrot.slane %v96, 1
    %v98 = vadd.f32 %v96, %v97
    %s99 = vtos %v98
    %s100 = scalar_lea.smem [#allocation8], 0
    %101 = sst [smem:[%s100]] %s99
    // Predicated region
    $region26: #{tpu_custom_call.1} parent=1 // pred_check
      _
    $region27: #{tpu_custom_call.1} parent=1 // pred_check_branch
      %103 = sbr.rel (0) target = $region29
    $region28: #{tpu_custom_call.1} parent=1 // pred_region
      %s105 = ssub.s32 16, 16
      %106 = vsyncadd [#allocation4], %s105
      %109 = dma.smem_to_hbm [#allocation8], 16, %s3, [#allocation4]
    $region29: #{tpu_custom_call.1} parent=1 // pred_fallthru
      _
    // Predicated region
    $region30: #{tpu_custom_call.1} parent=1 // pred_check
      _
    $region31: #{tpu_custom_call.1} parent=1 // pred_check_branch
      %111 = sbr.rel (0) target = $region33
    $region32: #{tpu_custom_call.1} parent=1 // pred_region
      %112 = dma.done [#allocation4], 16
    $region33: #{tpu_custom_call.1} parent=1 // pred_fallthru
      _
    %113 = sfence
    %114 = vsyncpa [#allocation3], 1
    %115 = vsyncpa [#allocation6], 1
    %116 = vsyncpa [#allocation4], 1

</llo_original>
